<compile_context>
chip_gen: v7x
topology: tpu7x:2x2x1
jax: 0.10.0
libtpu: 0.0.40
codegen_flags: <defaults>
</compile_context>

<pallas_src>
import jax
import jax.numpy as jnp
from jax.experimental import pallas as pl
from jax.experimental.pallas import tpu as pltpu


def _vmem_budget():
    """Generation-aware (scoped VMEM limit, per-step tile budget) in bytes."""
    cap = None
    try:
        cap = getattr(pltpu.get_tpu_info(), "vmem_capacity_bytes", None)
    except Exception:
        cap = None
    if not cap:
        cap = 64 * 1024 * 1024  # conservative default: v7x per-TensorCore VMEM
    limit = min((int(cap) * 3) // 4, 112 * 1024 * 1024)
    return int(limit), int(limit // 2)


def _divisors_desc(n):
    return [d for d in range(n, 0, -1) if n % d == 0]


def _pick_tiles(B, T, C, itemsize, budget):
    """Pick (TB, tc) for blocks of shape (TB, T, tc).

    Footprint model per grid step: double-buffered input + output tiles plus the
    two f32 working copies (x_f32 and the centered tile) ~= TB*T*tc*(4*itemsize+8).
    Prefers tc == C (contiguous DMA), then the largest TB that fits the budget.
    """
    bytes_per_elem = 4 * itemsize + 8

    def fits(tb, tc):
        return tb * T * tc * bytes_per_elem <= budget

    if C % 128 == 0:
        tc_cands = [tc for tc in _divisors_desc(C) if tc % 128 == 0]
    else:
        # Full channel dim is always a legal (if masked-store) block shape.
        tc_cands = [C]

    for tc in tc_cands:
        if fits(1, tc):
            for tb in _divisors_desc(B):
                if fits(tb, tc):
                    return tb, tc
    # Even the minimal legal tile busts the budget (very large T): run anyway.
    return 1, tc_cands[-1]


def _ensure_min_steps(B, C, tb, tc):
    """Make sure the parallel grid has >= 2 steps when possible (v7x: 2 TCs)."""
    if (B // tb) * (C // tc) >= 2:
        return tb, tc
    if tb > 1:
        # Split the batch tile first: keeps the DMA contiguous when tc == C.
        for d in range(tb - 1, 0, -1):
            if B % d == 0:
                return d, tc
    if tc % 256 == 0:  # only true on the lane-aligned path
        return tb, tc // 2
    return tb, tc


def _norm_kernel(eps):
    def kernel(x_ref, y_ref, mean_ref, std_ref):
        # x_ref: (TB, T, tc) block — TB batch elements, one channel tile each.
        x = x_ref[...].astype(jnp.float32)
        mean = jnp.mean(x, axis=1, keepdims=True)            # (TB, 1, tc)
        d = x - mean                                          # centered tile, reused
        var = jnp.mean(d * d, axis=1, keepdims=True)          # biased (unbiased=False)
        inv = jax.lax.rsqrt(var + eps)                        # EUP slot, off critical VALU path
        std = jnp.sqrt(var + eps)                             # tiny vector, stored for denorm
        y_ref[...] = (d * inv).astype(y_ref.dtype)            # broadcast multiply on VPU
        mean_ref[...] = mean.astype(mean_ref.dtype)
        std_ref[...] = std.astype(std_ref.dtype)
    return kernel


def _denorm_kernel(x_ref, mean_ref, std_ref, y_ref):
    x = x_ref[...].astype(jnp.float32)
    std = std_ref[...].astype(jnp.float32)                    # (TB, 1, tc)
    mean = mean_ref[...].astype(jnp.float32)
    y_ref[...] = (x * std + mean).astype(y_ref.dtype)


class InstanceNorm:
    """Pallas TPU implementation of the PyTorch InstanceNorm module."""

    def __init__(self, eps=1e-5):
        self.eps = eps
        self.mean = None
        self.stdev = None

    def __call__(self, x, mode: str):
        if mode == "norm":
            y, self.mean, self.stdev = self._norm(x)
            return y
        elif mode == "denorm":
            return self._denorm(x, self.mean, self.stdev)
        else:
            raise NotImplementedError

    def _tiling(self, x):
        B, T, C = x.shape
        limit, budget = _vmem_budget()
        tb, tc = _pick_tiles(B, T, C, jnp.dtype(x.dtype).itemsize, budget)
        tb, tc = _ensure_min_steps(B, C, tb, tc)
        grid = (B // tb, C // tc)
        return tb, tc, grid, limit

    def _norm(self, x):
        B, T, C = x.shape
        tb, tc, grid, limit = self._tiling(x)
        return pl.pallas_call(
            _norm_kernel(self.eps),
            grid=grid,
            in_specs=[pl.BlockSpec((tb, T, tc), lambda b, c: (b, 0, c))],
            out_specs=(
                pl.BlockSpec((tb, T, tc), lambda b, c: (b, 0, c)),
                pl.BlockSpec((tb, 1, tc), lambda b, c: (b, 0, c)),
                pl.BlockSpec((tb, 1, tc), lambda b, c: (b, 0, c)),
            ),
            out_shape=(
                jax.ShapeDtypeStruct((B, T, C), x.dtype),
                jax.ShapeDtypeStruct((B, 1, C), jnp.float32),
                jax.ShapeDtypeStruct((B, 1, C), jnp.float32),
            ),
            compiler_params=pltpu.CompilerParams(
                dimension_semantics=("parallel", "parallel"),
                vmem_limit_bytes=limit,
            ),
        )(x)

    def _denorm(self, x, mean, stdev):
        B, T, C = x.shape
        tb, tc, grid, limit = self._tiling(x)
        return pl.pallas_call(
            _denorm_kernel,
            grid=grid,
            in_specs=[
                pl.BlockSpec((tb, T, tc), lambda b, c: (b, 0, c)),
                pl.BlockSpec((tb, 1, tc), lambda b, c: (b, 0, c)),
                pl.BlockSpec((tb, 1, tc), lambda b, c: (b, 0, c)),
            ],
            out_specs=pl.BlockSpec((tb, T, tc), lambda b, c: (b, 0, c)),
            out_shape=jax.ShapeDtypeStruct((B, T, C), x.dtype),
            compiler_params=pltpu.CompilerParams(
                dimension_semantics=("parallel", "parallel"),
                vmem_limit_bytes=limit,
            ),
        )(x, mean, stdev)


def _reference_norm(x, eps):
    mean = jnp.mean(x, axis=1, keepdims=True)
    var = jnp.var(x, axis=1, keepdims=True)  # ddof=0 (unbiased=False)
    std = jnp.sqrt(var + eps)
    return (x - mean) / std, mean, std


def _run_case(key, B, T, C):
    x = jax.random.normal(key, (B, T, C), dtype=jnp.float32) * 3.0 + 1.5
    inorm = InstanceNorm(eps=1e-5)

    y = jax.block_until_ready(inorm(x, "norm"))
    x_rec = jax.block_until_ready(inorm(y, "denorm"))

    y_ref, mean_ref, std_ref = _reference_norm(x, 1e-5)
    assert jnp.allclose(y, y_ref, atol=1e-5, rtol=1e-5), "norm mismatch"
    assert jnp.allclose(inorm.mean, mean_ref, atol=1e-5, rtol=1e-5), "mean mismatch"
    assert jnp.allclose(inorm.stdev, std_ref, atol=1e-5, rtol=1e-5), "stdev mismatch"
    assert jnp.allclose(x_rec, x, atol=1e-4, rtol=1e-4), "denorm round-trip mismatch"


if __name__ == "__main__":
    key = jax.random.PRNGKey(0)
    k0, k1, k2 = jax.random.split(key, 3)

    # small, non-128-aligned channel dim (full-C block fallback path)
    _run_case(k0, B=2, T=8, C=32)
    # lane-aligned channel dim, full-C contiguous block
    _run_case(k1, B=2, T=16, C=256)
    # lane-aligned with batch tiling (TB > 1) exercised
    _run_case(k2, B=4, T=32, C=128)

    print("KERNEL_OK")
</pallas_src>

<mosaic_0001>
module attributes {stable_mosaic.version = 11 : i64} {
  func.func @kernel(%arg0: i32, %arg1: i32, %arg2: memref<1x8x32xf32, #tpu.memory_space<vmem>>, %arg3: memref<1x8x32xf32, #tpu.memory_space<vmem>>, %arg4: memref<1x1x32xf32, #tpu.memory_space<vmem>>, %arg5: memref<1x1x32xf32, #tpu.memory_space<vmem>>) attributes {dimension_semantics = [#tpu.dimension_semantics<parallel>, #tpu.dimension_semantics<parallel>], iteration_bounds = array<i64: 2, 1>, scalar_prefetch = 0 : i64, scratch_operands = 0 : i64, tpu.core_type = #tpu.core_type<tc>, window_params = [{transform_indices = @transform_0, window_bounds = array<i64: 1, 8, 32>}, {transform_indices = @transform_1, window_bounds = array<i64: 1, 8, 32>}, {transform_indices = @transform_2, window_bounds = array<i64: 1, 1, 32>}, {transform_indices = @transform_3, window_bounds = array<i64: 1, 1, 32>}]} {
    %c0 = arith.constant 0 : index
    %c0_0 = arith.constant 0 : index
    %c0_1 = arith.constant 0 : index
    %0 = vector.load %arg2[%c0, %c0_0, %c0_1] : memref<1x8x32xf32, #tpu.memory_space<vmem>>, vector<1x8x32xf32>
    %cst = arith.constant dense<0.000000e+00> : vector<1x32xf32>
    %1 = vector.multi_reduction <add>, %0, %cst [1] : vector<1x8x32xf32> to vector<1x32xf32>
    %2 = vector.shape_cast %1 : vector<1x32xf32> to vector<1x1x32xf32>
    %cst_2 = arith.constant 8.000000e+00 : f32
    %3 = vector.broadcast %cst_2 : f32 to vector<1x1x32xf32>
    %4 = arith.divf %2, %3 : vector<1x1x32xf32>
    %5 = vector.broadcast %4 : vector<1x1x32xf32> to vector<1x8x32xf32>
    %6 = arith.subf %0, %5 : vector<1x8x32xf32>
    %7 = arith.mulf %6, %6 : vector<1x8x32xf32>
    %cst_3 = arith.constant dense<0.000000e+00> : vector<1x32xf32>
    %8 = vector.multi_reduction <add>, %7, %cst_3 [1] : vector<1x8x32xf32> to vector<1x32xf32>
    %9 = vector.shape_cast %8 : vector<1x32xf32> to vector<1x1x32xf32>
    %cst_4 = arith.constant 8.000000e+00 : f32
    %10 = vector.broadcast %cst_4 : f32 to vector<1x1x32xf32>
    %11 = arith.divf %9, %10 : vector<1x1x32xf32>
    %cst_5 = arith.constant 9.99999974E-6 : f32
    %12 = vector.broadcast %cst_5 : f32 to vector<1x1x32xf32>
    %13 = arith.addf %11, %12 : vector<1x1x32xf32>
    %14 = math.rsqrt %13 : vector<1x1x32xf32>
    %cst_6 = arith.constant 9.99999974E-6 : f32
    %15 = vector.broadcast %cst_6 : f32 to vector<1x1x32xf32>
    %16 = arith.addf %11, %15 : vector<1x1x32xf32>
    %17 = math.sqrt %16 : vector<1x1x32xf32>
    %18 = vector.broadcast %14 : vector<1x1x32xf32> to vector<1x8x32xf32>
    %19 = arith.mulf %6, %18 : vector<1x8x32xf32>
    %c0_7 = arith.constant 0 : index
    %c0_8 = arith.constant 0 : index
    %c0_9 = arith.constant 0 : index
    %20 = vector.load %arg3[%c0_7, %c0_8, %c0_9] : memref<1x8x32xf32, #tpu.memory_space<vmem>>, vector<1x8x32xf32>
    tpu.vector_store %arg3[%c0_7, %c0_8, %c0_9], %19 {strides = array<i32>} : memref<1x8x32xf32, #tpu.memory_space<vmem>>, vector<1x8x32xf32>,
    %c0_10 = arith.constant 0 : index
    %c0_11 = arith.constant 0 : index
    %c0_12 = arith.constant 0 : index
    %21 = vector.load %arg4[%c0_10, %c0_11, %c0_12] : memref<1x1x32xf32, #tpu.memory_space<vmem>>, vector<1x1x32xf32>
    tpu.vector_store %arg4[%c0_10, %c0_11, %c0_12], %4 {strides = array<i32>} : memref<1x1x32xf32, #tpu.memory_space<vmem>>, vector<1x1x32xf32>,
    %c0_13 = arith.constant 0 : index
    %c0_14 = arith.constant 0 : index
    %c0_15 = arith.constant 0 : index
    %22 = vector.load %arg5[%c0_13, %c0_14, %c0_15] : memref<1x1x32xf32, #tpu.memory_space<vmem>>, vector<1x1x32xf32>
    tpu.vector_store %arg5[%c0_13, %c0_14, %c0_15], %17 {strides = array<i32>} : memref<1x1x32xf32, #tpu.memory_space<vmem>>, vector<1x1x32xf32>,
    return
  }
  func.func @transform_0(%arg0: i32, %arg1: i32) -> (i32, i32, i32) {
    %c0_i32 = arith.constant 0 : i32
    %c0_i32_0 = arith.constant 0 : i32
    return %arg0, %c0_i32, %arg1 : i32, i32, i32
  }
  func.func @transform_1(%arg0: i32, %arg1: i32) -> (i32, i32, i32) {
    %c0_i32 = arith.constant 0 : i32
    %c0_i32_0 = arith.constant 0 : i32
    return %arg0, %c0_i32, %arg1 : i32, i32, i32
  }
  func.func @transform_2(%arg0: i32, %arg1: i32) -> (i32, i32, i32) {
    %c0_i32 = arith.constant 0 : i32
    %c0_i32_0 = arith.constant 0 : i32
    return %arg0, %c0_i32, %arg1 : i32, i32, i32
  }
  func.func @transform_3(%arg0: i32, %arg1: i32) -> (i32, i32, i32) {
    %c0_i32 = arith.constant 0 : i32
    %c0_i32_0 = arith.constant 0 : i32
    return %arg0, %c0_i32, %arg1 : i32, i32, i32
  }
}

</mosaic_0001>

<llo_original>
// kernel: tpu_custom_call.1
$region0: #{tpu_custom_call.1}
  #allocation0 [shape = 'u32[]', space=smem, size = 0x4, offset = 0x4, fixed_abs, tag = 'smem constant byte address 0x4 - core index']
  #allocation1 [shape = 'u32[144,128]{1,0:T(1,128)}', space=vmem, size = 0x12000, scoped, tag = 'internal scratch']
  %s0 = inlined_call_operand.hbm [shape: f32[2,8,32], index: 0, kind: input, shape index: {}]
  %s1 = inlined_call_operand.hbm [shape: f32[2,8,32], index: 1, kind: output, shape index: {0}]
  %s2 = inlined_call_operand.hbm [shape: f32[2,1,32], index: 2, kind: output, shape index: {1}]
  %s3 = inlined_call_operand.hbm [shape: f32[2,1,32], index: 3, kind: output, shape index: {2}]
  %4 = xla_tuple %s1, %s2, %s3
  %s5 = sld [smem:[#allocation0]]
  $region57: #{tpu_custom_call.1} parent=0
    _
  %s7 = ssub.s32 1, %s5
  %s8 = scalar_select 0, %s7, %s5
  $region1: #{tpu_custom_call.1} parent=0
    #allocation2 [shape = 'u8[8192]{0}', space=vmem, size = 0x2000, scoped, tag = 'input window, operand 0']
    #allocation3 [shape = 's32[2]{0}', space=sflag, size = 0x8, scoped, tag = 'scoped memory for tpu_custom_call.1']
    #allocation4 [shape = 's32[2]{0}', space=sflag, size = 0x8, scoped, tag = 'scoped memory for tpu_custom_call.1']
    #allocation5 [shape = 'u8[8192]{0}', space=vmem, size = 0x2000, scoped, tag = 'output window, operand 0']
    #allocation6 [shape = 'u8[1024]{0}', space=vmem, size = 0x400, scoped, tag = 'output window, operand 1']
    #allocation7 [shape = 's32[2]{0}', space=sflag, size = 0x8, scoped, tag = 'scoped memory for tpu_custom_call.1']
    #allocation8 [shape = 'u8[1024]{0}', space=vmem, size = 0x400, scoped, tag = 'output window, operand 2']
    %9 = vsyncpa [#allocation3], 0
    %s10 = scalar_lea.sflag [#allocation3], 1
    %11 = vsyncpa %s10, 0
    %12 = vsyncpa [#allocation4], 0
    %s13 = scalar_lea.sflag [#allocation4], 1
    %14 = vsyncpa %s13, 0
    %15 = vsyncpa [#allocation7], 0
    %s16 = scalar_lea.sflag [#allocation7], 1
    %17 = vsyncpa %s16, 0
    loop: start=0, step=1, limit=4
    $region2: #{tpu_custom_call.1} parent=1 // loop_pre_header
      _
    $region3: #{tpu_custom_call.1} parent=1 // loop_header
      %s19 = sphi 0, %s23
      %p20 = scmp.ge.s32.totalorder %s19, 4
      %s26 = sphi 0, %s38
      %s27 = sphi 0, %s34
      %s28 = sphi 0, %s26
      %s29 = sphi 0, %s27
      %s30 = sphi 0, %s28
      %s31 = sphi 0, %s29
      %s43 = sphi 0, %s45
      %s46 = sphi 0, %s43
      %s47 = sphi 0, %s46
      %s63 = sphi 0, %s47
      %s71 = sphi 0, %s73
      %s74 = sphi 0, %s71
      %s75 = sphi 0, %s74
      %s91 = sphi 0, %s75
      %s99 = sphi 0, %s101
      %s102 = sphi 0, %s99
      %s103 = sphi 0, %s102
      %s119 = sphi 0, %s103
      %s127 = sphi 0, %s129
      %s130 = sphi 0, %s127
      %s131 = sphi 0, %s130
      %s147 = sphi 0, %s131
    $region4: #{tpu_custom_call.1} parent=1 // loop_header_branch
      %22 = sbr.rel (%p20) target = $region8
    $region5: #{tpu_custom_call.1} parent=1 // loop_body
      %s24 = ssub.s32 %s19, 1
      %s25 = ssub.s32 %s19, 2
      %s32 = sadd.s32 1, %s27
      %p33 = scmp.ge.s32.totalorder %s32, 1
      %s34 = scalar_select %p33, 0, %s32
      %s35 = sadd.s32 1, %s26
      %s36 = scalar_select %p33, %s35, %s26
      %p37 = scmp.ge.s32.totalorder %s36, 2
      %s38 = scalar_select %p37, 0, %s36
      %s39 = ssub.s32 %s26, %s38
      %s40 = ssub.s32 %s27, %s34
      %s41 = sor.u32 %s39, %s40
      %p42 = scmp.eq.s32.totalorder %s41, 0
      %s44 = sadd.s32 %s43, 1
      %s45 = scalar_select %p42, %s43, %s44
      %p48 = pneg %p42
      %p49 = scmp.eq.s32.totalorder %s19, 1
      %p50 = por %p48, %p49
      %p51 = scmp.ne.s32.totalorder %s43, %s46
      %p52 = scmp.eq.s32.totalorder %s19, 0
      %p53 = por %p51, %p52
      %p54 = scmp.ne.s32.totalorder %s43, %s46
      %p55 = scmp.eq.s32.totalorder %s24, 1
      %p56 = por %p54, %p55
      %p57 = scmp.ne.s32.totalorder %s46, %s47
      %p58 = scmp.eq.s32.totalorder %s24, 0
      %p59 = por %p57, %p58
      %p60 = scmp.ne.s32.totalorder %s46, %s47
      %p61 = scmp.eq.s32.totalorder %s25, 1
      %p62 = por %p60, %p61
      %p64 = scmp.ne.s32.totalorder %s47, %s63
      %p65 = scmp.eq.s32.totalorder %s25, 0
      %p66 = por %p64, %p65
      %s67 = ssub.s32 %s26, %s38
      %s68 = ssub.s32 %s27, %s34
      %s69 = sor.u32 %s67, %s68
      %p70 = scmp.eq.s32.totalorder %s69, 0
      %s72 = sadd.s32 %s71, 1
      %s73 = scalar_select %p70, %s71, %s72
      %p76 = pneg %p70
      %p77 = scmp.eq.s32.totalorder %s19, 1
      %p78 = por %p76, %p77
      %p79 = scmp.ne.s32.totalorder %s71, %s74
      %p80 = scmp.eq.s32.totalorder %s19, 0
      %p81 = por %p79, %p80
      %p82 = scmp.ne.s32.totalorder %s71, %s74
      %p83 = scmp.eq.s32.totalorder %s24, 1
      %p84 = por %p82, %p83
      %p85 = scmp.ne.s32.totalorder %s74, %s75
      %p86 = scmp.eq.s32.totalorder %s24, 0
      %p87 = por %p85, %p86
      %p88 = scmp.ne.s32.totalorder %s74, %s75
      %p89 = scmp.eq.s32.totalorder %s25, 1
      %p90 = por %p88, %p89
      %p92 = scmp.ne.s32.totalorder %s75, %s91
      %p93 = scmp.eq.s32.totalorder %s25, 0
      %p94 = por %p92, %p93
      %s95 = ssub.s32 %s26, %s38
      %s96 = ssub.s32 %s27, %s34
      %s97 = sor.u32 %s95, %s96
      %p98 = scmp.eq.s32.totalorder %s97, 0
      %s100 = sadd.s32 %s99, 1
      %s101 = scalar_select %p98, %s99, %s100
      %p104 = pneg %p98
      %p105 = scmp.eq.s32.totalorder %s19, 1
      %p106 = por %p104, %p105
      %p107 = scmp.ne.s32.totalorder %s99, %s102
      %p108 = scmp.eq.s32.totalorder %s19, 0
      %p109 = por %p107, %p108
      %p110 = scmp.ne.s32.totalorder %s99, %s102
      %p111 = scmp.eq.s32.totalorder %s24, 1
      %p112 = por %p110, %p111
      %p113 = scmp.ne.s32.totalorder %s102, %s103
      %p114 = scmp.eq.s32.totalorder %s24, 0
      %p115 = por %p113, %p114
      %p116 = scmp.ne.s32.totalorder %s102, %s103
      %p117 = scmp.eq.s32.totalorder %s25, 1
      %p118 = por %p116, %p117
      %p120 = scmp.ne.s32.totalorder %s103, %s119
      %p121 = scmp.eq.s32.totalorder %s25, 0
      %p122 = por %p120, %p121
      %s123 = ssub.s32 %s26, %s38
      %s124 = ssub.s32 %s27, %s34
      %s125 = sor.u32 %s123, %s124
      %p126 = scmp.eq.s32.totalorder %s125, 0
      %s128 = sadd.s32 %s127, 1
      %s129 = scalar_select %p126, %s127, %s128
      %p132 = pneg %p126
      %p133 = scmp.eq.s32.totalorder %s19, 1
      %p134 = por %p132, %p133
      %p135 = scmp.ne.s32.totalorder %s127, %s130
      %p136 = scmp.eq.s32.totalorder %s19, 0
      %p137 = por %p135, %p136
      %p138 = scmp.ne.s32.totalorder %s127, %s130
      %p139 = scmp.eq.s32.totalorder %s24, 1
      %p140 = por %p138, %p139
      %p141 = scmp.ne.s32.totalorder %s130, %s131
      %p142 = scmp.eq.s32.totalorder %s24, 0
      %p143 = por %p141, %p142
      %p144 = scmp.ne.s32.totalorder %s130, %s131
      %p145 = scmp.eq.s32.totalorder %s25, 1
      %p146 = por %p144, %p145
      %p148 = scmp.ne.s32.totalorder %s131, %s147
      %p149 = scmp.eq.s32.totalorder %s25, 0
      %p150 = por %p148, %p149
      %p151 = scmp.le.s32.totalorder 1, %s19
      %p152 = scmp.lt.s32.totalorder %s19, 3
      %p153 = pnand %p151, %p152
      %p154 = pneg %p153
      // Predicated region
      $region9: #{tpu_custom_call.1} parent=5 // pred_check
        _
      $region10: #{tpu_custom_call.1} parent=5 // pred_check_branch
        %156 = sbr.rel (%p153) target = $region12
      $region11: #{tpu_custom_call.1} parent=5 // pred_region
        %s157 = ssub.s32 %s19, 1
      $region12: #{tpu_custom_call.1} parent=5 // pred_fallthru
        _
      %p158 = scmp.lt.s32.totalorder %s19, 2
      // Predicated region
      $region13: #{tpu_custom_call.1} parent=5 // pred_check
        %p159 = pneg %p158
      $region14: #{tpu_custom_call.1} parent=5 // pred_check_branch
        %161 = sbr.rel (%p159) target = $region16
      $region15: #{tpu_custom_call.1} parent=5 // pred_region
        // Predicated region
        $region17: #{tpu_custom_call.1} parent=15 // pred_check
          %p162 = pneg %p53
        $region18: #{tpu_custom_call.1} parent=15 // pred_check_branch
          %164 = sbr.rel (%p162) target = $region20
        $region19: #{tpu_custom_call.1} parent=15 // pred_region
          %s165 = sand.u32 %s43, 1
          %s166 = scalar_lea.sflag [#allocation3], %s165
          %s167 = sand.u32 %s43, 1
          %s168 = smul.addr %s167, 8
          %s169 = scalar_lea.vmem [#allocation2], %s168
          %s171 = ssub.s32 128, 128
          %172 = vsyncadd %s166, %s171
          %s173 = sadd.s32 %s27, %s26
          %s174 = smul.addr %s173, 128
          %s175 = scalar_lea.hbm %s0, %s174
          %s177 = sshll.u32 %s169, 4
          %s178 = int_to_ptr.vmem [resolvable:$true] %s177
          %180 = dma.hbm_to_vmem [thread:$0]  %s175, 128, %s178, %s166
        $region20: #{tpu_custom_call.1} parent=15 // pred_fallthru
          _
      $region16: #{tpu_custom_call.1} parent=5 // pred_fallthru
        _
      %p181 = scmp.le.s32.totalorder 1, %s19
      %p182 = scmp.lt.s32.totalorder %s19, 3
      %p183 = pnand %p181, %p182
      %p184 = pneg %p183
      // Predicated region
      $region21: #{tpu_custom_call.1} parent=5 // pred_check
        _
      $region22: #{tpu_custom_call.1} parent=5 // pred_check_branch
        %186 = sbr.rel (%p183) target = $region24
      $region23: #{tpu_custom_call.1} parent=5 // pred_region
        %s187 = ssub.s32 %s19, 1
        %s188 = sand.u32 %s46, 1
        %s189 = scalar_lea.sflag [#allocation3], %s188
        %s190 = sand.u32 %s46, 1
        %s191 = smul.addr %s190, 8
        %s192 = scalar_lea.vmem [#allocation2], %s191
        // Predicated region
        $region25: #{tpu_custom_call.1} parent=23 // pred_check
          %p193 = pneg %p59
        $region26: #{tpu_custom_call.1} parent=23 // pred_check_branch
          %195 = sbr.rel (%p193) target = $region28
        $region27: #{tpu_custom_call.1} parent=23 // pred_region
          %196 = dma.done %s189, 128
        $region28: #{tpu_custom_call.1} parent=23 // pred_fallthru
          _
        %s197 = sand.u32 %s46, 1
        %s198 = scalar_lea.sflag [#allocation3], %s197
        %s199 = sand.u32 %s46, 1
        %s200 = smul.addr %s199, 8
        %s201 = scalar_lea.vmem [#allocation2], %s200
        %p202 = pneg %p59
        %p203 = pneg %p56
        %p204 = pneg %p87
        %p205 = pneg %p84
        %s206 = sand.u32 %s74, 1
        %s207 = scalar_lea.sflag [#allocation4], %s206
        %s208 = sand.u32 %s74, 1
        %s209 = smul.addr %s208, 8
        %s210 = scalar_lea.vmem [#allocation5], %s209
        %p211 = pneg %p115
        %p212 = pneg %p112
        %s213 = sand.u32 %s24, 1
        %s214 = scalar_lea.sflag [#allocation7], %s213
        %s215 = sand.u32 %s102, 1
        %s216 = scalar_lea.vmem [#allocation6], %s215
        %p217 = pneg %p143
        %p218 = pneg %p140
        %s219 = sand.u32 %s24, 1
        %s220 = scalar_lea.sflag [#allocation7], %s219
        %s221 = sand.u32 %s130, 1
        %s222 = scalar_lea.vmem [#allocation8], %s221
        %v223 = vld [vmem:[%s192] sm:$0xff]
        %vm224 = vcmask 261120
        %v225 = vsel %vm224, %v223, 0.0
        %v226 = vrot.slane %v225, 4
        %v227 = vadd.f32 %v225, %v226
        %v228 = vrot.slane %v227, 2
        %v229 = vadd.f32 %v227, %v228
        %v230 = vrot.slane %v229, 1
        %v231 = vadd.f32 %v229, %v230
        %v232 = vrcp.pop 8.0
        %v233 = vmul.f32 %v231, %v232
        %v234 = vsub.f32 %v223, %v233
        %v235 = vmul.f32 %v234, %v234
        %v236 = vsel %vm224, %v235, 0.0
        %v237 = vrot.slane %v236, 4
        %v238 = vadd.f32 %v236, %v237
        %v239 = vrot.slane %v238, 2
        %v240 = vadd.f32 %v238, %v239
        %v241 = vrot.slane %v240, 1
        %v242 = vadd.f32 %v240, %v241
        %v243 = vmul.f32 %v242, %v232
        %v244 = vadd.f32 %v243, 1e-05
        %v245 = vrsqrt.pop %v244
        %v246 = vrsqrt.pop %v244
        %v247 = vmul.f32 %v244, %v246
        %vm248 = vcmp.eq.f32.partialorder %v244, inf
        %v249 = vsel %vm248, %v244, %v247
        %vm250 = vcmp.eq.f32.partialorder %v244, 0.0
        %v251 = vand.u32 %v244, 2147483648
        %v252 = vsel %vm250, %v251, %v249
        %v253 = vmul.f32 %v234, %v245
        %254 = vst.msk [vmem:[%s210] sm:$0xff] %vm224, %v253
        %vm255 = vcmask 253952
        %256 = vst.msk [vmem:[%s216] sm:$0x1] %vm255, %v233
        %257 = vst.msk [vmem:[%s222] sm:$0x1] %vm255, %v252
        %s258 = sand.u32 %s74, 1
        %s259 = scalar_lea.sflag [#allocation4], %s258
        %s260 = sand.u32 %s74, 1
        %s261 = smul.addr %s260, 8
        %s262 = scalar_lea.vmem [#allocation5], %s261
        %s263 = sand.u32 %s24, 1
        %s264 = scalar_lea.sflag [#allocation7], %s263
        %s265 = sand.u32 %s102, 1
        %s266 = scalar_lea.vmem [#allocation6], %s265
        %s267 = sand.u32 %s24, 1
        %s268 = scalar_lea.sflag [#allocation7], %s267
        %s269 = sand.u32 %s130, 1
        %s270 = scalar_lea.vmem [#allocation8], %s269
        // Predicated region
        $region29: #{tpu_custom_call.1} parent=23 // pred_check
          %p271 = pneg %p84
        $region30: #{tpu_custom_call.1} parent=23 // pred_check_branch
          %273 = sbr.rel (%p271) target = $region32
        $region31: #{tpu_custom_call.1} parent=23 // pred_region
          %s275 = ssub.s32 128, 128
          %276 = vsyncadd %s259, %s275
          %s277 = sadd.s32 %s29, %s28
          %s278 = smul.addr %s277, 128
          %s279 = scalar_lea.hbm %s1, %s278
          %s281 = sshll.u32 %s262, 4
          %s282 = int_to_ptr.vmem [resolvable:$true] %s281
          %284 = dma.vmem_to_hbm [thread:$0]  %s282, 128, %s279, %s259
        $region32: #{tpu_custom_call.1} parent=23 // pred_fallthru
          _
        // Predicated region
        $region33: #{tpu_custom_call.1} parent=23 // pred_check
          %p285 = pneg %p112
        $region34: #{tpu_custom_call.1} parent=23 // pred_check_branch
          %287 = sbr.rel (%p285) target = $region36
        $region35: #{tpu_custom_call.1} parent=23 // pred_region
          %s289 = ssub.s32 16, 16
          %290 = vsyncadd %s264, %s289
          %s291 = sadd.s32 %s29, %s28
          %s292 = smul.addr %s291, 16
          %s293 = scalar_lea.hbm %s2, %s292
          %s295 = sshll.u32 %s266, 4
          %s296 = int_to_ptr.vmem [resolvable:$true] %s295
          %298 = dma.vmem_to_hbm [thread:$0]  %s296, 16, %s293, %s264
        $region36: #{tpu_custom_call.1} parent=23 // pred_fallthru
          _
        // Predicated region
        $region37: #{tpu_custom_call.1} parent=23 // pred_check
          %p299 = pneg %p140
        $region38: #{tpu_custom_call.1} parent=23 // pred_check_branch
          %301 = sbr.rel (%p299) target = $region40
        $region39: #{tpu_custom_call.1} parent=23 // pred_region
          %s303 = ssub.s32 16, 16
          %304 = vsyncadd %s268, %s303
          %s305 = sadd.s32 %s29, %s28
          %s306 = smul.addr %s305, 16
          %s307 = scalar_lea.hbm %s3, %s306
          %s309 = sshll.u32 %s270, 4
          %s310 = int_to_ptr.vmem [resolvable:$true] %s309
          %312 = dma.vmem_to_hbm [thread:$0]  %s310, 16, %s307, %s268
        $region40: #{tpu_custom_call.1} parent=23 // pred_fallthru
          _
      $region24: #{tpu_custom_call.1} parent=5 // pred_fallthru
        _
      %p313 = scmp.le.s32.totalorder 2, %s19
      // Predicated region
      $region41: #{tpu_custom_call.1} parent=5 // pred_check
        %p314 = pneg %p313
      $region42: #{tpu_custom_call.1} parent=5 // pred_check_branch
        %316 = sbr.rel (%p314) target = $region44
      $region43: #{tpu_custom_call.1} parent=5 // pred_region
        %s317 = ssub.s32 %s19, 2
        // Predicated region
        $region45: #{tpu_custom_call.1} parent=43 // pred_check
          %p318 = pneg %p90
        $region46: #{tpu_custom_call.1} parent=43 // pred_check_branch
          %320 = sbr.rel (%p318) target = $region48
        $region47: #{tpu_custom_call.1} parent=43 // pred_region
          %s321 = sand.u32 %s75, 1
          %s322 = scalar_lea.sflag [#allocation4], %s321
          %s323 = sand.u32 %s75, 1
          %s324 = smul.addr %s323, 8
          %s325 = scalar_lea.vmem [#allocation5], %s324
          %326 = dma.done %s322, 128
        $region48: #{tpu_custom_call.1} parent=43 // pred_fallthru
          _
        // Predicated region
        $region49: #{tpu_custom_call.1} parent=43 // pred_check
          %p327 = pneg %p118
        $region50: #{tpu_custom_call.1} parent=43 // pred_check_branch
          %329 = sbr.rel (%p327) target = $region52
        $region51: #{tpu_custom_call.1} parent=43 // pred_region
          %s330 = sand.u32 %s25, 1
          %s331 = scalar_lea.sflag [#allocation7], %s330
          %s332 = sand.u32 %s103, 1
          %s333 = scalar_lea.vmem [#allocation6], %s332
          %334 = dma.done %s331, 16
        $region52: #{tpu_custom_call.1} parent=43 // pred_fallthru
          _
        // Predicated region
        $region53: #{tpu_custom_call.1} parent=43 // pred_check
          %p335 = pneg %p146
        $region54: #{tpu_custom_call.1} parent=43 // pred_check_branch
          %337 = sbr.rel (%p335) target = $region56
        $region55: #{tpu_custom_call.1} parent=43 // pred_region
          %s338 = sand.u32 %s25, 1
          %s339 = scalar_lea.sflag [#allocation7], %s338
          %s340 = sand.u32 %s131, 1
          %s341 = scalar_lea.vmem [#allocation8], %s340
          %342 = dma.done %s339, 16
        $region56: #{tpu_custom_call.1} parent=43 // pred_fallthru
          _
      $region44: #{tpu_custom_call.1} parent=5 // pred_fallthru
        _
    $region6: #{tpu_custom_call.1} parent=1 // loop_footer
      %s23 = sadd.s32 1, %s19
    $region7: #{tpu_custom_call.1} parent=1 // loop_footer_branch
      %18 = sbr.rel target = $region3
    $region8: #{tpu_custom_call.1} parent=1 // loop_exit
      _
    %343 = vsyncpa [#allocation3], 1
    %s344 = scalar_lea.sflag [#allocation3], 1
    %345 = vsyncpa %s344, 1
    %346 = vsyncpa [#allocation4], 1
    %s347 = scalar_lea.sflag [#allocation4], 1
    %348 = vsyncpa %s347, 1
    %349 = vsyncpa [#allocation7], 1
    %s350 = scalar_lea.sflag [#allocation7], 1
    %351 = vsyncpa %s350, 1

</llo_original>
